<compile_context>
chip_gen: v7x
topology: tpu7x:2x2x1
jax: 0.10.0
libtpu: 0.0.40
codegen_flags: <defaults>
</compile_context>

<pallas_src>
import math

import jax
import jax.numpy as jnp
from jax.experimental import pallas as pl
from jax.experimental.pallas import tpu as pltpu


def _layer_scale_kernel(x_ref, g_ref, o_ref):
    # x_ref: (tm, tn) tile of flattened rows; g_ref: (1, tn) gamma row
    # (broadcast over the sublane axis by the VPU). Multiply runs in the
    # promoted (output) dtype to match PyTorch's `x * gamma`.
    o_ref[...] = x_ref[...].astype(o_ref.dtype) * g_ref[...]


def _round_down(x: int, m: int) -> int:
    return (x // m) * m


def _round_up(x: int, m: int) -> int:
    return ((x + m - 1) // m) * m


def layer_scale(
    x: jax.Array,
    gamma: jax.Array,
    *,
    target_tile_bytes: int | None = None,   # None -> generation-aware default
    max_tn: int = 16384,                    # split columns only for huge D
    donate_x: bool = False,                 # alias x buffer to the output
) -> jax.Array:
    """Computes x * gamma, gamma broadcast along the last axis."""
    orig_shape = x.shape
    dim = orig_shape[-1]
    assert gamma.shape == (dim,)

    out_dtype = jnp.result_type(x.dtype, gamma.dtype)
    x_item = jnp.dtype(x.dtype).itemsize
    out_item = jnp.dtype(out_dtype).itemsize
    pack = max(8, 32 // x_item)  # sublane packing: 8 f32, 16 bf16, 32 int8/fp8

    m = 1
    for s in orig_shape[:-1]:
        m *= s

    # ---- lane-dense folding -------------------------------------------------
    # If dim is not a multiple of 128, fold k rows into the last axis (and tile
    # gamma k times) so every store uses all 128 lanes. Bit-exact row-major
    # relayout; requires m % k == 0.
    k = 1
    if dim % 128 != 0:
        k_cand = 128 // math.gcd(dim, 128)
        if k_cand > 1 and m % k_cand == 0:
            k = k_cand
    # TODO(synk): when the fold cannot apply (dim % 128 != 0 and m % k != 0),
    # stores fall back to masked partial-lane vst.msk; fix the layout upstream
    # (pad D to a multiple of 128 at the model level) rather than in-kernel.

    dim_eff = dim * k
    m_eff = m // k

    x2 = x.reshape(m_eff, dim_eff)
    g_eff = gamma if k == 1 else jnp.tile(gamma, k)
    g2 = g_eff.reshape(1, dim_eff).astype(out_dtype)

    # ---- generation-aware sizing --------------------------------------------
    try:
        vmem_cap = int(pltpu.get_tpu_info().vmem_capacity_bytes)
    except Exception:
        vmem_cap = 64 * (1 << 20)  # conservative (v7x per-TC)

    if target_tile_bytes is None:
        # Higher-BW / smaller-VMEM chips (v7x, 64 MiB) want bigger tiles so the
        # ~0.35 us per-grid-step overhead stays small vs 2*tile/HBM_BW.
        target_tile_bytes = 8 * (1 << 20) if vmem_cap >= 96 * (1 << 20) else 12 * (1 << 20)

    # Column tile: full row unless it is huge, then a multiple of 128.
    if dim_eff % 128 == 0 and dim_eff > max_tn:
        tn = max_tn
    else:
        tn = dim_eff
    n_col = pl.cdiv(dim_eff, tn)

    # ---- row tile: VMEM-budgeted, balanced, enough grid steps ----------------
    x_row = tn * x_item
    out_row = tn * out_item
    g_bytes = tn * out_item

    # Double-buffered x + out tiles (+ double-buffered gamma) must fit.
    vmem_budget = max(int(0.70 * vmem_cap) - 2 * g_bytes, 2 * pack * (x_row + out_row))
    tm_vmem = max(pack, vmem_budget // (2 * (x_row + out_row)))
    tm_target = max(pack, target_tile_bytes // x_row)
    tm_max = max(pack, _round_down(min(tm_vmem, tm_target), pack))

    if m_eff <= tm_max:
        tm = m_eff  # single row block; block == full dim is a legal shape
    else:
        # Balanced blocks: avoid a near-empty trailing block / uneven TC halves.
        n_row = pl.cdiv(m_eff, tm_max)
        tm = max(pack, _round_up(pl.cdiv(m_eff, n_row), pack))
    n_row = pl.cdiv(m_eff, tm)

    # Guarantee enough steps for megacore sharding (v7x: 2 TCs) and pipelining,
    # but only when there is meaningful work to split (>= ~2 MiB of input).
    min_steps = 4
    if (
        n_row * n_col < min_steps
        and m_eff >= min_steps * pack
        and m_eff * x_row >= (2 << 20)
    ):
        tm = max(pack, _round_down(m_eff // min_steps, pack))
        n_row = pl.cdiv(m_eff, tm)

    # ---- grid ordering: columns outer so gamma is not re-DMA'd per step ------
    if n_col > 1:
        grid = (n_col, n_row)
        x_map = lambda j, i: (i, j)
        g_map = lambda j, i: (0, j)
        dim_sem = ("parallel", "parallel")
    else:
        grid = (n_row,)
        x_map = lambda i: (i, 0)
        g_map = lambda i: (0, 0)  # constant block index -> fetched once, revisited
        dim_sem = ("parallel",)

    # ---- VMEM limit derived from actual tiles, clamped to chip capacity ------
    needed = 2 * tm * tn * (x_item + out_item) + 2 * g_bytes + (2 << 20)
    vmem_limit = min(_round_up(needed, 1 << 20), int(0.9 * vmem_cap))

    io_aliases = {}
    if donate_x and jnp.dtype(x.dtype) == jnp.dtype(out_dtype):
        io_aliases = {0: 0}  # x2 aliased to the output (elementwise in-place safe)

    out = pl.pallas_call(
        _layer_scale_kernel,
        out_shape=jax.ShapeDtypeStruct((m_eff, dim_eff), out_dtype),
        grid_spec=pltpu.PrefetchScalarGridSpec(
            num_scalar_prefetch=0,
            grid=grid,
            in_specs=[
                pl.BlockSpec((tm, tn), x_map),
                pl.BlockSpec((1, tn), g_map),
            ],
            out_specs=pl.BlockSpec((tm, tn), x_map),
        ),
        compiler_params=pltpu.CompilerParams(
            dimension_semantics=dim_sem,
            vmem_limit_bytes=vmem_limit,
        ),
        input_output_aliases=io_aliases,
    )(x2, g2)

    return out.reshape(orig_shape)


if __name__ == "__main__":
    key = jax.random.PRNGKey(0)
    B, N, D = 2, 8, 32
    init_values = 1e-5

    x = jax.random.normal(key, (B, N, D), dtype=jnp.float32)
    # Deterministic parameter init, matching nn.Parameter(init_values * ones(dim)).
    gamma = init_values * jnp.ones((D,), dtype=jnp.float32)

    y = layer_scale(x, gamma)
    y = jax.block_until_ready(y)
    ref = x * gamma
    assert y.dtype == ref.dtype
    assert jnp.allclose(y, ref, atol=1e-7), "mismatch vs reference"

    # Non-folding shape with a partial edge row block (cdiv-grid masking path).
    x_b = jax.random.normal(jax.random.PRNGKey(1), (3, 5, 128), dtype=jnp.float32)
    g_b = init_values * jnp.ones((128,), dtype=jnp.float32)
    y_b = jax.block_until_ready(layer_scale(x_b, g_b))
    assert jnp.allclose(y_b, x_b * g_b, atol=1e-7), "mismatch vs reference (edge block)"

    # Mixed-dtype promotion path (bf16 x, f32 gamma -> f32 out, like PyTorch).
    x_c = jax.random.normal(jax.random.PRNGKey(2), (2, 8, 32), dtype=jnp.bfloat16)
    g_c = init_values * jnp.ones((32,), dtype=jnp.float32)
    y_c = jax.block_until_ready(layer_scale(x_c, g_c))
    ref_c = x_c * g_c
    assert y_c.dtype == ref_c.dtype == jnp.float32
    assert jnp.allclose(y_c, ref_c, atol=1e-7), "mismatch vs reference (promotion)"

    # Multi-block / folded (D=192 -> k=2) shape to exercise the tiling logic.
    x_d = jax.random.normal(jax.random.PRNGKey(3), (16, 64, 192), dtype=jnp.float32)
    g_d = init_values * jnp.ones((192,), dtype=jnp.float32)
    y_d = jax.block_until_ready(layer_scale(x_d, g_d))
    assert jnp.allclose(y_d, x_d * g_d, atol=1e-7), "mismatch vs reference (fold)"

    print("KERNEL_OK")
</pallas_src>

<mosaic_0001>
module attributes {stable_mosaic.version = 11 : i64} {
  func.func @_layer_scale_kernel(%arg0: i32, %arg1: memref<4x128xf32, #tpu.memory_space<vmem>>, %arg2: memref<1x128xf32, #tpu.memory_space<vmem>>, %arg3: memref<4x128xf32, #tpu.memory_space<vmem>>) attributes {dimension_semantics = [#tpu.dimension_semantics<parallel>], iteration_bounds = array<i64: 1>, scalar_prefetch = 0 : i64, scratch_operands = 0 : i64, tpu.core_type = #tpu.core_type<tc>, window_params = [{transform_indices = @transform_0, window_bounds = array<i64: 4, 128>}, {pipeline_mode = #tpu.pipeline_mode<synchronous>, transform_indices = @transform_1, window_bounds = array<i64: 1, 128>}, {transform_indices = @transform_2, window_bounds = array<i64: 4, 128>}]} {
    %c0 = arith.constant 0 : index
    %c0_0 = arith.constant 0 : index
    %0 = vector.load %arg1[%c0, %c0_0] : memref<4x128xf32, #tpu.memory_space<vmem>>, vector<4x128xf32>
    %c0_1 = arith.constant 0 : index
    %c0_2 = arith.constant 0 : index
    %1 = vector.load %arg2[%c0_1, %c0_2] : memref<1x128xf32, #tpu.memory_space<vmem>>, vector<1x128xf32>
    %2 = vector.broadcast %1 : vector<1x128xf32> to vector<4x128xf32>
    %3 = arith.mulf %0, %2 : vector<4x128xf32>
    %c0_3 = arith.constant 0 : index
    %c0_4 = arith.constant 0 : index
    %4 = vector.load %arg3[%c0_3, %c0_4] : memref<4x128xf32, #tpu.memory_space<vmem>>, vector<4x128xf32>
    tpu.vector_store %arg3[%c0_3, %c0_4], %3 {strides = array<i32>} : memref<4x128xf32, #tpu.memory_space<vmem>>, vector<4x128xf32>,
    return
  }
  func.func @transform_0(%arg0: i32) -> (i32, i32) {
    %c0_i32 = arith.constant 0 : i32
    %c0_i32_0 = arith.constant 0 : i32
    return %arg0, %c0_i32 : i32, i32
  }
  func.func @transform_1(%arg0: i32) -> (i32, i32) {
    %c0_i32 = arith.constant 0 : i32
    %c0_i32_0 = arith.constant 0 : i32
    %c0_i32_1 = arith.constant 0 : i32
    return %c0_i32, %c0_i32_0 : i32, i32
  }
  func.func @transform_2(%arg0: i32) -> (i32, i32) {
    %c0_i32 = arith.constant 0 : i32
    %c0_i32_0 = arith.constant 0 : i32
    return %arg0, %c0_i32 : i32, i32
  }
}

</mosaic_0001>

<llo_original>
// kernel: tpu_custom_call.1
$region0: #{tpu_custom_call.1}
  #allocation0 [shape = 'u32[]', space=smem, size = 0x4, offset = 0x4, fixed_abs, tag = 'smem constant byte address 0x4 - core index']
  #allocation1 [shape = 'u32[144,128]{1,0:T(1,128)}', space=vmem, size = 0x12000, scoped, tag = 'internal scratch']
  %s0 = inlined_call_operand.hbm [shape: f32[4,128], index: 0, kind: input, shape index: {}]
  %s1 = inlined_call_operand.vmem [shape: f32[1,128], index: 1, kind: input, shape index: {}]
  %s2 = inlined_call_operand.hbm [shape: f32[4,128], index: 2, kind: output, shape index: {}]
  %s3 = sld [smem:[#allocation0]]
  $region22: #{tpu_custom_call.1} parent=0
    _
  %s5 = ssub.s32 1, %s3
  %s6 = scalar_select 0, %s5, %s3
  $region1: #{tpu_custom_call.1} parent=0
    #allocation2 [shape = 'u8[2048]{0}', space=vmem, size = 0x800, scoped, tag = 'input window, operand 0, single buffered']
    #allocation3 [shape = 's32[1]{0}', space=sflag, size = 0x4, scoped, tag = 'scoped memory for tpu_custom_call.1']
    #allocation4 [shape = 's32[1]{0}', space=sflag, size = 0x4, scoped, tag = 'scoped memory for tpu_custom_call.1']
    #allocation5 [shape = 'u8[2048]{0}', space=vmem, size = 0x800, scoped, tag = 'output window, operand 0, single buffered']
    %7 = vsyncpa [#allocation3], 0
    %8 = vsyncpa [#allocation4], 0
    // Predicated region
    $region2: #{tpu_custom_call.1} parent=1 // pred_check
      _
    $region3: #{tpu_custom_call.1} parent=1 // pred_check_branch
      %10 = sbr.rel (0) target = $region5
    $region4: #{tpu_custom_call.1} parent=1 // pred_region
      %s12 = ssub.s32 64, 64
      %13 = vsyncadd [#allocation3], %s12
      %s15 = sshll.u32 [#allocation2], 4
      %s16 = int_to_ptr.vmem [resolvable:$true] %s15
      %18 = dma.hbm_to_vmem [thread:$0]  %s0, 64, %s16, [#allocation3]
    $region5: #{tpu_custom_call.1} parent=1 // pred_fallthru
      _
    // Predicated region
    $region6: #{tpu_custom_call.1} parent=1 // pred_check
      _
    $region7: #{tpu_custom_call.1} parent=1 // pred_check_branch
      %20 = sbr.rel (0) target = $region9
    $region8: #{tpu_custom_call.1} parent=1 // pred_region
      _
    $region9: #{tpu_custom_call.1} parent=1 // pred_fallthru
      _
    // Predicated region
    $region10: #{tpu_custom_call.1} parent=1 // pred_check
      _
    $region11: #{tpu_custom_call.1} parent=1 // pred_check_branch
      %22 = sbr.rel (0) target = $region13
    $region12: #{tpu_custom_call.1} parent=1 // pred_region
      %23 = dma.done [#allocation3], 64
    $region13: #{tpu_custom_call.1} parent=1 // pred_fallthru
      _
    %v24 = vld [vmem:[#allocation2] sm:$0xf]
    %v25 = vld [vmem:[%s1] sm:$0x1]
    %v27 = vlaneseq
    %v28 = vshrl.u32 %v27, 7
    %v29 = vsub.s32 0, %v28
    %v30 = vrot.slane %v25, %v29
    %v32 = vmul.f32 %v24, %v30
    %33 = vst [vmem:[#allocation5] sm:$0xf] %v32
    // Predicated region
    $region14: #{tpu_custom_call.1} parent=1 // pred_check
      _
    $region15: #{tpu_custom_call.1} parent=1 // pred_check_branch
      %35 = sbr.rel (0) target = $region17
    $region16: #{tpu_custom_call.1} parent=1 // pred_region
      %s37 = ssub.s32 64, 64
      %38 = vsyncadd [#allocation4], %s37
      %s40 = sshll.u32 [#allocation5], 4
      %s41 = int_to_ptr.vmem [resolvable:$true] %s40
      %43 = dma.vmem_to_hbm [thread:$0]  %s41, 64, %s2, [#allocation4]
    $region17: #{tpu_custom_call.1} parent=1 // pred_fallthru
      _
    // Predicated region
    $region18: #{tpu_custom_call.1} parent=1 // pred_check
      _
    $region19: #{tpu_custom_call.1} parent=1 // pred_check_branch
      %45 = sbr.rel (0) target = $region21
    $region20: #{tpu_custom_call.1} parent=1 // pred_region
      %46 = dma.done [#allocation4], 64
    $region21: #{tpu_custom_call.1} parent=1 // pred_fallthru
      _
    %47 = vsyncpa [#allocation3], 1
    %48 = vsyncpa [#allocation4], 1

</llo_original>
